<compile_context>
chip_gen: v6e
topology: v6e:2x2x1
jax: 0.10.0
libtpu: 0.0.40
codegen_flags: <defaults>
</compile_context>

<pallas_src>
import jax
import jax.numpy as jnp
import numpy as np
from jax.experimental import pallas as pl
from jax.experimental.pallas import tpu as pltpu


def _leaky_relu(v):
    return jnp.where(v > 0, v, 0.2 * v)          # GATConv default negative_slope=0.2


def _elu(v):
    return jnp.where(v > 0, v, jnp.exp(v) - 1.0)  # F.elu, alpha=1


def _round_up(v, m):
    return -(-v // m) * m


def _vmem_limit_bytes():
    # Derive the scoped-VMEM request from the hardware instead of hardcoding:
    # ~3/4 of physical (48 MiB on v7x's 64 MiB, 96 MiB on v5e/v6e's 128 MiB).
    try:
        cap = pltpu.get_tpu_info().vmem_capacity_bytes
    except Exception:
        cap = 64 * 1024 * 1024
    return min((cap * 3) // 4, 96 * 1024 * 1024)


# --------------------------------------------------------------------------
# Kernel 1 (per GAT layer): row-tiled linear transform + per-node attention
# scores.  scores[:, :H] are source scores, scores[:, H:] are destination
# scores; both come out of ONE matmul against a block-diagonal attention matrix.
# --------------------------------------------------------------------------
def gat_transform_kernel(x_ref, w_ref, a_ref, h_ref, s_ref):
    x = x_ref[...].astype(jnp.bfloat16)
    w = w_ref[...].astype(jnp.bfloat16)
    h = jnp.dot(x, w, preferred_element_type=jnp.float32)          # [tm, H*C]
    hb = h.astype(jnp.bfloat16)
    h_ref[...] = hb                                                 # bf16 for alpha@h later
    s_ref[...] = jnp.dot(hb, a_ref[...].astype(jnp.bfloat16),
                         preferred_element_type=jnp.float32)        # [tm, 2H]


# --------------------------------------------------------------------------
# Kernel 2 (per GAT layer): dst-row-tiled masked softmax + neighborhood
# aggregation.  e/p/alpha are [tile, N]; adjacency arrives as an int8 row slab
# that BlockSpec double-buffers; the head loop writes one full-width slab.
# --------------------------------------------------------------------------
def gat_attention_kernel(adj_ref, sdst_ref, ssrcT_ref, h_ref, b_ref, out_ref):
    num_heads = ssrcT_ref.shape[0] // 2
    c_per_head = h_ref.shape[1] // num_heads

    edge = adj_ref[...].astype(jnp.float32) > 0.0                   # [tq, N] mask (int8 in HBM)
    s_dst = sdst_ref[...]                                           # [tq, 2H]
    s_srcT = ssrcT_ref[...]                                         # [2H, N] lane-dense
    h_all = h_ref[...]                                              # [N, H*C] bf16

    outs = []
    # TODO(synk): for large head counts switch to lax.fori_loop(unroll=True) or a
    # head grid axis to bound live ranges of the [tq, N] temporaries.
    for hd in range(num_heads):
        e = s_dst[:, num_heads + hd:num_heads + hd + 1] + s_srcT[hd:hd + 1, :]
        e = _leaky_relu(e)
        e = jnp.where(edge, e, -1e9)                                # no f32 bias slab
        m = jnp.max(e, axis=-1, keepdims=True)
        p = jnp.exp(e - m)
        alpha = p * pl.reciprocal(jnp.sum(p, axis=-1, keepdims=True), approx=True)
        outs.append(jnp.dot(alpha.astype(jnp.bfloat16),
                            h_all[:, hd * c_per_head:(hd + 1) * c_per_head],
                            preferred_element_type=jnp.float32))    # [tq, C]
    out = jnp.concatenate(outs, axis=-1) + b_ref[...]               # one full-width store
    out_ref[...] = _elu(out)


# --------------------------------------------------------------------------
# Kernel 3: question-focused attention pooling.  Lane-dense [1, N] softmax,
# exact reciprocal (final output), weighted pooling on the MXU.
# --------------------------------------------------------------------------
def qa_pool_kernel(ent_ref, q_ref, mask_ref, we_ref, wq_ref, bq_ref,
                   graph_ref, attn_ref):
    ent = ent_ref[...]                                              # [N, C2] f32
    ent_b = ent.astype(jnp.bfloat16)
    logits = jnp.dot(ent_b, we_ref[...].astype(jnp.bfloat16),
                     preferred_element_type=jnp.float32)            # [N, 1]
    q_bias = jnp.dot(q_ref[...].astype(jnp.bfloat16),
                     wq_ref[...].astype(jnp.bfloat16),
                     preferred_element_type=jnp.float32) + bq_ref[...]   # [1, 1]
    logits_row = logits.T + q_bias + (mask_ref[...] - 1.0) * 1e9         # [1, N] lane-dense
    m = jnp.max(logits_row, axis=-1, keepdims=True)
    p = jnp.exp(logits_row - m)
    attn = p / jnp.sum(p, axis=-1, keepdims=True)                   # exact divide here
    attn_ref[...] = attn
    graph_ref[...] = jnp.dot(attn.astype(jnp.bfloat16), ent_b,
                             preferred_element_type=jnp.float32)    # [1, C2] on the MXU


# --------------------------------------------------------------------------
# Wrapper glue
# --------------------------------------------------------------------------
def _gat_layer(x, adj, w, a_bd, b, row_tile, vmem_limit):
    n_pad, f_in = x.shape
    hc = w.shape[1]
    two_h = a_bd.shape[1]
    grid = (n_pad // row_tile,)
    cparams = pltpu.CompilerParams(dimension_semantics=("parallel",),
                                   vmem_limit_bytes=vmem_limit)

    h_bf16, scores = pl.pallas_call(
        gat_transform_kernel,
        grid=grid,
        in_specs=[pl.BlockSpec((row_tile, f_in), lambda i: (i, 0)),
                  pl.BlockSpec((f_in, hc), lambda i: (0, 0)),
                  pl.BlockSpec((hc, two_h), lambda i: (0, 0))],
        out_specs=(pl.BlockSpec((row_tile, hc), lambda i: (i, 0)),
                   pl.BlockSpec((row_tile, two_h), lambda i: (i, 0))),
        out_shape=(jax.ShapeDtypeStruct((n_pad, hc), jnp.bfloat16),
                   jax.ShapeDtypeStruct((n_pad, two_h), jnp.float32)),
        compiler_params=cparams,
    )(x, w, a_bd)

    # Layout plumbing only (tiny [N, 2H] array): present per-source scores
    # lane-dense so the attention kernel needs no in-kernel transpose.
    scores_t = scores.T

    # TODO(synk): sweep pipeline_mode=pl.Buffered(3) on the adjacency BlockSpec
    # at production N (default depth 2 is enough on v7x's 3.2 TB/s HBM).
    out = pl.pallas_call(
        gat_attention_kernel,
        grid=grid,
        in_specs=[pl.BlockSpec((row_tile, n_pad), lambda i: (i, 0)),   # int8 adj row slab
                  pl.BlockSpec((row_tile, two_h), lambda i: (i, 0)),   # dst scores (tile)
                  pl.BlockSpec((two_h, n_pad), lambda i: (0, 0)),      # src scores (lane-dense)
                  pl.BlockSpec((n_pad, hc), lambda i: (0, 0)),         # transformed feats (bf16)
                  pl.BlockSpec((1, hc), lambda i: (0, 0))],            # bias
        out_specs=pl.BlockSpec((row_tile, hc), lambda i: (i, 0)),
        out_shape=jax.ShapeDtypeStruct((n_pad, hc), jnp.float32),
        compiler_params=cparams,
    )(adj, scores, scores_t, h_bf16, b)
    return out


def gnn_qa_forward(entity_features, edge_index, question_embedding,
                   question_entity_mask, place_entity_mask, params):
    # place_entity_mask is an argument of the PyTorch forward but is never used.
    del place_entity_mask
    n = entity_features.shape[0]
    num_heads, c1 = params["as1"].shape
    c2 = params["b2"].shape[1]

    row_tile = 256 if n >= 256 else _round_up(n, 8)
    n_pad = _round_up(n, row_tile)
    vmem_limit = _vmem_limit_bytes()

    # Dense int8 adjacency adj[dst, src] from edge_index (+ self loops, GATConv
    # defaults).  Padded rows/cols have no edges / mask=0, so they never affect
    # real rows and drop out of every softmax exactly.
    # TODO(synk): at production N keep edge_index in CSR form and gather row
    # slabs in the kernel (scalar prefetch / manual DMA) instead of a dense scatter.
    adj = jnp.zeros((n_pad, n_pad), jnp.int8)
    adj = adj.at[edge_index[1], edge_index[0]].set(1)
    adj = adj.at[jnp.arange(n), jnp.arange(n)].set(1)

    x = jnp.zeros((n_pad, entity_features.shape[1]), jnp.float32)
    x = x.at[:n].set(entity_features.astype(jnp.float32))
    q2d = question_embedding.reshape(1, -1).astype(jnp.float32)
    mask_row = jnp.zeros((1, n_pad), jnp.float32)
    mask_row = mask_row.at[0, :n].set(question_entity_mask.astype(jnp.float32))

    # Block-diagonal attention vectors: all per-head src/dst scores = ONE matmul.
    eye_h = jnp.eye(num_heads, dtype=jnp.float32)
    as1_bd = jnp.einsum("hc,hk->hck", params["as1"], eye_h).reshape(num_heads * c1, num_heads)
    ad1_bd = jnp.einsum("hc,hk->hck", params["ad1"], eye_h).reshape(num_heads * c1, num_heads)
    a1_bd = jnp.concatenate([as1_bd, ad1_bd], axis=1)                  # [H*C1, 2H]
    a2_bd = jnp.concatenate([params["as2"].T, params["ad2"].T], axis=1)  # [C2, 2]

    x1 = _gat_layer(x, adj, params["w1"], a1_bd, params["b1"], row_tile, vmem_limit)
    ent_pad = _gat_layer(x1, adj, params["w2"], a2_bd, params["b2"], row_tile, vmem_limit)

    graph, attn = pl.pallas_call(
        qa_pool_kernel,
        in_specs=[pl.BlockSpec(memory_space=pltpu.MemorySpace.VMEM)] * 6,
        out_specs=(pl.BlockSpec(memory_space=pltpu.MemorySpace.VMEM),
                   pl.BlockSpec(memory_space=pltpu.MemorySpace.VMEM)),
        out_shape=(jax.ShapeDtypeStruct((1, c2), jnp.float32),
                   jax.ShapeDtypeStruct((1, n_pad), jnp.float32)),
        compiler_params=pltpu.CompilerParams(vmem_limit_bytes=vmem_limit),
    )(ent_pad, q2d, mask_row, params["wq_e"], params["wq_q"], params["bq"])

    return graph[0], ent_pad[:n], attn[0, :n]


# --------------------------------------------------------------------------
# Pure-JAX reference of the same dense-GAT math (f32) for a correctness check.
# --------------------------------------------------------------------------
def reference_forward(entity_features, edge_index, question_embedding,
                      question_entity_mask, params):
    n = entity_features.shape[0]
    adj = jnp.zeros((n, n), jnp.float32)
    adj = adj.at[edge_index[1], edge_index[0]].set(1.0)
    adj = adj.at[jnp.arange(n), jnp.arange(n)].set(1.0)

    def gat(x, w, a_s, a_d, b):
        nh, c = a_s.shape
        h = x @ w
        outs = []
        for hd in range(nh):
            hh = h[:, hd * c:(hd + 1) * c]
            s = jnp.sum(hh * a_s[hd], -1, keepdims=True)
            d = jnp.sum(hh * a_d[hd], -1, keepdims=True)
            e = jnp.where(adj > 0, _leaky_relu(d + s.T), -1e9)
            al = jax.nn.softmax(e, axis=-1)
            outs.append(al @ hh)
        return jnp.concatenate(outs, -1) + b[0]

    x1 = _elu(gat(entity_features, params["w1"], params["as1"], params["ad1"], params["b1"]))
    ent = _elu(gat(x1, params["w2"], params["as2"], params["ad2"], params["b2"]))
    logits = (ent @ params["wq_e"] + question_embedding.reshape(1, -1) @ params["wq_q"]
              + params["bq"])[:, 0]
    logits = logits + (question_entity_mask.astype(jnp.float32) - 1.0) * 1e9
    attn = jax.nn.softmax(logits, axis=0)
    graph = jnp.sum(attn[:, None] * ent, axis=0)
    return graph, ent, attn


def make_params(key, num_feat, hidden, heads, out_ch, q_dim):
    ks = jax.random.split(key, 12)
    rnd = lambda k, s: (0.1 * jax.random.normal(k, s)).astype(jnp.float32)
    return {
        # GATConv 1: in=num_feat, out=hidden, heads=heads (concat)
        "w1": rnd(ks[0], (num_feat, heads * hidden)),
        "as1": rnd(ks[1], (heads, hidden)),
        "ad1": rnd(ks[2], (heads, hidden)),
        "b1": rnd(ks[3], (1, heads * hidden)),
        # GATConv 2: in=heads*hidden, out=out_ch, heads=1
        "w2": rnd(ks[4], (heads * hidden, out_ch)),
        "as2": rnd(ks[5], (1, out_ch)),
        "ad2": rnd(ks[6], (1, out_ch)),
        "b2": rnd(ks[7], (1, out_ch)),
        # attn_q: Linear(out_ch + q_dim, 1) split into entity- and question-parts
        "wq_e": rnd(ks[8], (out_ch, 1)),
        "wq_q": rnd(ks[9], (q_dim, 1)),
        "bq": rnd(ks[10], (1, 1)),
    }


if __name__ == "__main__":
    N, NF, HID, HEADS, OUT, QD, E = 16, 8, 8, 2, 8, 8, 32

    key = jax.random.PRNGKey(0)
    k_x, k_src, k_dst, k_q, k_m, k_p = jax.random.split(key, 6)

    entity_features = jax.random.normal(k_x, (N, NF), jnp.float32)
    edge_index = jnp.stack([jax.random.randint(k_src, (E,), 0, N),
                            jax.random.randint(k_dst, (E,), 0, N)], axis=0)
    question_embedding = jax.random.normal(k_q, (QD,), jnp.float32)
    question_entity_mask = jax.random.bernoulli(k_m, 0.5, (N,)).astype(jnp.float32)
    question_entity_mask = question_entity_mask.at[0].set(1.0)  # at least one relevant entity
    place_entity_mask = jax.random.bernoulli(k_p, 0.5, (N,)).astype(jnp.float32)  # unused

    params = make_params(jax.random.PRNGKey(42), NF, HID, HEADS, OUT, QD)

    graph_rep, ent_reps, attn_w = gnn_qa_forward(
        entity_features, edge_index, question_embedding,
        question_entity_mask, place_entity_mask, params)
    jax.block_until_ready((graph_rep, ent_reps, attn_w))

    g_ref, e_ref, a_ref = reference_forward(
        entity_features, edge_index, question_embedding, question_entity_mask, params)
    # Tolerances account for bf16 MXU operands (f32 accumulate) and the approx
    # EUP reciprocal used in the two GAT softmaxes.
    np.testing.assert_allclose(np.asarray(graph_rep), np.asarray(g_ref), rtol=5e-2, atol=2e-2)
    np.testing.assert_allclose(np.asarray(ent_reps), np.asarray(e_ref), rtol=5e-2, atol=2e-2)
    np.testing.assert_allclose(np.asarray(attn_w), np.asarray(a_ref), rtol=5e-2, atol=2e-2)

    assert graph_rep.shape == (OUT,)
    assert ent_reps.shape == (N, OUT)
    assert attn_w.shape == (N,)
    print("KERNEL_OK")
</pallas_src>

<mosaic_0001>
module attributes {stable_mosaic.version = 11 : i64} {
  func.func @gat_transform_kernel(%arg0: i32, %arg1: memref<16x8xf32, #tpu.memory_space<vmem>>, %arg2: memref<8x16xf32, #tpu.memory_space<vmem>>, %arg3: memref<16x4xf32, #tpu.memory_space<vmem>>, %arg4: memref<16x16xbf16, #tpu.memory_space<vmem>>, %arg5: memref<16x4xf32, #tpu.memory_space<vmem>>) attributes {dimension_semantics = [#tpu.dimension_semantics<parallel>], iteration_bounds = array<i64: 1>, scalar_prefetch = 0 : i64, scratch_operands = 0 : i64, tpu.core_type = #tpu.core_type<tc>, window_params = [{transform_indices = @transform_0, window_bounds = array<i64: 16, 8>}, {pipeline_mode = #tpu.pipeline_mode<synchronous>, transform_indices = @transform_1, window_bounds = array<i64: 8, 16>}, {pipeline_mode = #tpu.pipeline_mode<synchronous>, transform_indices = @transform_2, window_bounds = array<i64: 16, 4>}, {transform_indices = @transform_3, window_bounds = array<i64: 16, 16>}, {transform_indices = @transform_4, window_bounds = array<i64: 16, 4>}]} {
    %c0 = arith.constant 0 : index
    %c0_0 = arith.constant 0 : index
    %0 = vector.load %arg1[%c0, %c0_0] : memref<16x8xf32, #tpu.memory_space<vmem>>, vector<16x8xf32>
    %1 = arith.truncf %0 : vector<16x8xf32> to vector<16x8xbf16>
    %c0_1 = arith.constant 0 : index
    %c0_2 = arith.constant 0 : index
    %2 = vector.load %arg2[%c0_1, %c0_2] : memref<8x16xf32, #tpu.memory_space<vmem>>, vector<8x16xf32>
    %3 = arith.truncf %2 : vector<8x16xf32> to vector<8x16xbf16>
    %cst = arith.constant dense<0.000000e+00> : vector<16x16xf32>
    %4 = tpu.matmul %1, %3, %cst {dimension_numbers = #tpu.dot_dimension_numbers<[1], [0], [0], [1], [0, 0, 1, 1], [], []>} : vector<16x8xbf16>, vector<8x16xbf16>, vector<16x16xf32> -> vector<16x16xf32>
    %5 = arith.truncf %4 : vector<16x16xf32> to vector<16x16xbf16>
    %c0_3 = arith.constant 0 : index
    %c0_4 = arith.constant 0 : index
    %6 = vector.load %arg4[%c0_3, %c0_4] : memref<16x16xbf16, #tpu.memory_space<vmem>>, vector<16x16xbf16>
    tpu.vector_store %arg4[%c0_3, %c0_4], %5 {strides = array<i32>} : memref<16x16xbf16, #tpu.memory_space<vmem>>, vector<16x16xbf16>,
    %c0_5 = arith.constant 0 : index
    %c0_6 = arith.constant 0 : index
    %7 = vector.load %arg3[%c0_5, %c0_6] : memref<16x4xf32, #tpu.memory_space<vmem>>, vector<16x4xf32>
    %8 = arith.truncf %7 : vector<16x4xf32> to vector<16x4xbf16>
    %cst_7 = arith.constant dense<0.000000e+00> : vector<16x4xf32>
    %9 = tpu.matmul %5, %8, %cst_7 {dimension_numbers = #tpu.dot_dimension_numbers<[1], [0], [0], [1], [0, 0, 1, 1], [], []>} : vector<16x16xbf16>, vector<16x4xbf16>, vector<16x4xf32> -> vector<16x4xf32>
    %c0_8 = arith.constant 0 : index
    %c0_9 = arith.constant 0 : index
    %10 = vector.load %arg5[%c0_8, %c0_9] : memref<16x4xf32, #tpu.memory_space<vmem>>, vector<16x4xf32>
    tpu.vector_store %arg5[%c0_8, %c0_9], %9 {strides = array<i32>} : memref<16x4xf32, #tpu.memory_space<vmem>>, vector<16x4xf32>,
    return
  }
  func.func @transform_0(%arg0: i32) -> (i32, i32) {
    %c0_i32 = arith.constant 0 : i32
    %c0_i32_0 = arith.constant 0 : i32
    return %arg0, %c0_i32 : i32, i32
  }
  func.func @transform_1(%arg0: i32) -> (i32, i32) {
    %c0_i32 = arith.constant 0 : i32
    %c0_i32_0 = arith.constant 0 : i32
    %c0_i32_1 = arith.constant 0 : i32
    return %c0_i32, %c0_i32_0 : i32, i32
  }
  func.func @transform_2(%arg0: i32) -> (i32, i32) {
    %c0_i32 = arith.constant 0 : i32
    %c0_i32_0 = arith.constant 0 : i32
    %c0_i32_1 = arith.constant 0 : i32
    return %c0_i32, %c0_i32_0 : i32, i32
  }
  func.func @transform_3(%arg0: i32) -> (i32, i32) {
    %c0_i32 = arith.constant 0 : i32
    %c0_i32_0 = arith.constant 0 : i32
    return %arg0, %c0_i32 : i32, i32
  }
  func.func @transform_4(%arg0: i32) -> (i32, i32) {
    %c0_i32 = arith.constant 0 : i32
    %c0_i32_0 = arith.constant 0 : i32
    return %arg0, %c0_i32 : i32, i32
  }
}

</mosaic_0001>

<llo_original>
// kernel: tpu_custom_call.1
$region0: #{tpu_custom_call.1}
  #allocation0 [shape = 'u32[]', space=smem, size = 0x4, offset = 0x4, fixed_abs, tag = 'smem constant byte address 0x4 - core index']
  #allocation1 [shape = 'u32[144,128]{1,0:T(1,128)}', space=vmem, size = 0x12000, scoped, tag = 'internal scratch']
  %s0 = inlined_call_operand.vmem [shape: f32[16,8], index: 0, kind: input, shape index: {}]
  %s1 = inlined_call_operand.vmem [shape: f32[8,16], index: 1, kind: input, shape index: {}]
  %s2 = inlined_call_operand.vmem [shape: f32[16,4], index: 2, kind: input, shape index: {}]
  %s3 = inlined_call_operand.hbm [shape: bf16[16,16], index: 3, kind: output, shape index: {0}]
  %s4 = inlined_call_operand.vmem [shape: f32[16,4], index: 4, kind: output, shape index: {1}]
  %5 = xla_tuple %s3, %s4
  %s6 = sld [smem:[#allocation0]]
  $region30: #{tpu_custom_call.1} parent=0
    _
  %s8 = ssub.s32 1, %s6
  %s9 = scalar_select 0, %s8, %s6
  $region1: #{tpu_custom_call.1} parent=0
    #allocation2 [shape = 'u8[4096]{0}', space=vmem, size = 0x1000, scoped, tag = 'output window, operand 0, single buffered']
    #allocation3 [shape = 's32[1]{0}', space=sflag, size = 0x4, scoped, tag = 'scoped memory for tpu_custom_call.1']
    %10 = vsyncpa [#allocation3], 0
    // Predicated region
    $region2: #{tpu_custom_call.1} parent=1 // pred_check
      _
    $region3: #{tpu_custom_call.1} parent=1 // pred_check_branch
      %12 = sbr.rel (0) target = $region5
    $region4: #{tpu_custom_call.1} parent=1 // pred_region
      _
    $region5: #{tpu_custom_call.1} parent=1 // pred_fallthru
      _
    // Predicated region
    $region6: #{tpu_custom_call.1} parent=1 // pred_check
      _
    $region7: #{tpu_custom_call.1} parent=1 // pred_check_branch
      %14 = sbr.rel (0) target = $region9
    $region8: #{tpu_custom_call.1} parent=1 // pred_region
      _
    $region9: #{tpu_custom_call.1} parent=1 // pred_fallthru
      _
    // Predicated region
    $region10: #{tpu_custom_call.1} parent=1 // pred_check
      _
    $region11: #{tpu_custom_call.1} parent=1 // pred_check_branch
      %16 = sbr.rel (0) target = $region13
    $region12: #{tpu_custom_call.1} parent=1 // pred_region
      _
    $region13: #{tpu_custom_call.1} parent=1 // pred_fallthru
      _
    %v18 = vld [vmem:[%s0] sm:$0xff]
    %v19 = vld [vmem:[%s0 + $0x8] sm:$0xff]
    %v20 = vpack.c.bf16 %v19, %v18
    %v21 = vld [vmem:[%s1] sm:$0xff]
    %v22 = vpack.c.bf16 %v21, %v21
    %vm23 = vcmask 64512
    %v25 = vsel %vm23, %v20, 0
    %vm27 = vcmask 1043456
    %v29 = vsel %vm27, %v22, 0
    %31 = vmatprep.subr.bf16.mxu0 0
    %32 = vmatpush1.bf16.msra.mxu0 0
    %33 = vmatprep.subr.bf16.mxu0 0
    %34 = vmatpush1.bf16.msra.mxu0 0
    %35 = vmatprep.subr.bf16.mxu0 0
    %36 = vmatpush1.bf16.msra.mxu0 0
    %37 = vmatprep.subr.bf16.mxu0 0
    %38 = vmatpush1.bf16.msra.mxu0 0
    %39 = vmatprep.subr.bf16.mxu0 0
    %40 = vmatpush1.bf16.msra.mxu0 0
    %41 = vmatprep.subr.bf16.mxu0 0
    %42 = vmatpush1.bf16.msra.mxu0 0
    %43 = vmatprep.subr.bf16.mxu0 0
    %44 = vmatpush1.bf16.msra.mxu0 0
    %45 = vmatprep.subr.bf16.mxu0 0
    %46 = vmatpush1.bf16.msra.mxu0 %v29
    %47 = vmatprep.subr.bf16.mxu0 0
    %48 = vmatpush2.bf16.msra.mxu0 0
    %49 = vmatprep.subr.bf16.mxu0 0
    %50 = vmatpush2.bf16.msra.mxu0 0
    %51 = vmatprep.subr.bf16.mxu0 0
    %52 = vmatpush2.bf16.msra.mxu0 0
    %53 = vmatprep.subr.bf16.mxu0 0
    %54 = vmatpush2.bf16.msra.mxu0 0
    %55 = vmatprep.subr.bf16.mxu0 0
    %56 = vmatpush2.bf16.msra.mxu0 0
    %57 = vmatprep.subr.bf16.mxu0 0
    %58 = vmatpush2.bf16.msra.mxu0 0
    %59 = vmatprep.subr.bf16.mxu0 0
    %60 = vmatpush2.bf16.msra.mxu0 0
    %61 = vmatprep.subr.bf16.mxu0 0
    %62 = vmatpush2.bf16.msra.mxu0 0
    %63 = vmatprep.mubr.bf16.mxu0 0
    %64 = vmatmul.mubr.bf16.gmra.mxu0 %v25
    %v65 = vpop.f32.mrf.mxu0
    %v66 = vadd.f32 0.0, %v65
    %v67 = vpop.f32.mrf.mxu0
    %v68 = vpop.f32.mrf.mxu0
    %v69 = vadd.f32 0.0, %v68
    %v70 = vpop.f32.mrf.mxu0
    %71 = vdwg.mxu0
    %v72 = vpack.c.bf16 %v69, %v66
    %v74 = vunpack.c.l.b16 %v72
    %v75 = vunpack.c.h.b16 %v72
    %v76 = vpack.c.b16 %v74, %v74
    %v77 = vpack.c.b16 %v75, %v75
    %vm80 = vcmask 125952
    %81 = vst.msk [vmem:[#allocation2] sm:$0xf] %vm80, %v76
    %82 = vst.msk [vmem:[#allocation2 + $0x4] sm:$0xf] %vm80, %v77
    %v83 = vld [vmem:[%s2] sm:$0xff]
    %v84 = vld [vmem:[%s2 + $0x8] sm:$0xff]
    %v85 = vpack.c.bf16 %v84, %v83
    %vm86 = vcmask 130048
    %v88 = vsel %vm86, %v72, 0
    %90 = vmatprep.subr.bf16.mxu0 0
    %91 = vmatpush1.bf16.msra.mxu0 0
    %92 = vmatprep.subr.bf16.mxu0 0
    %93 = vmatpush1.bf16.msra.mxu0 0
    %94 = vmatprep.subr.bf16.mxu0 0
    %95 = vmatpush1.bf16.msra.mxu0 0
    %96 = vmatprep.subr.bf16.mxu0 0
    %97 = vmatpush1.bf16.msra.mxu0 0
    %98 = vmatprep.subr.bf16.mxu0 0
    %99 = vmatpush1.bf16.msra.mxu0 0
    %100 = vmatprep.subr.bf16.mxu0 0
    %101 = vmatpush1.bf16.msra.mxu0 0
    %102 = vmatprep.subr.bf16.mxu0 0
    %103 = vmatpush1.bf16.msra.mxu0 0
    %104 = vmatprep.subr.bf16.mxu0 0
    %105 = vmatpush1.bf16.msra.mxu0 %v85
    %106 = vmatprep.subr.bf16.mxu0 0
    %107 = vmatpush2.bf16.msra.mxu0 0
    %108 = vmatprep.subr.bf16.mxu0 0
    %109 = vmatpush2.bf16.msra.mxu0 0
    %110 = vmatprep.subr.bf16.mxu0 0
    %111 = vmatpush2.bf16.msra.mxu0 0
    %112 = vmatprep.subr.bf16.mxu0 0
    %113 = vmatpush2.bf16.msra.mxu0 0
    %114 = vmatprep.subr.bf16.mxu0 0
    %115 = vmatpush2.bf16.msra.mxu0 0
    %116 = vmatprep.subr.bf16.mxu0 0
    %117 = vmatpush2.bf16.msra.mxu0 0
    %118 = vmatprep.subr.bf16.mxu0 0
    %119 = vmatpush2.bf16.msra.mxu0 0
    %120 = vmatprep.subr.bf16.mxu0 0
    %121 = vmatpush2.bf16.msra.mxu0 0
    %122 = vmatprep.mubr.bf16.mxu0 0
    %123 = vmatmul.mubr.bf16.gmra.mxu0 %v88
    %v124 = vpop.f32.mrf.mxu0
    %v125 = vadd.f32 0.0, %v124
    %v126 = vpop.f32.mrf.mxu0
    %v127 = vpop.f32.mrf.mxu0
    %v128 = vadd.f32 0.0, %v127
    %v129 = vpop.f32.mrf.mxu0
    %130 = vdwg.mxu0
    %vm131 = vcmask 31744
    %132 = vst.msk [vmem:[%s4] sm:$0xff] %vm131, %v125
    %133 = vst.msk [vmem:[%s4 + $0x8] sm:$0xff] %vm131, %v128
    // Predicated region
    $region14: #{tpu_custom_call.1} parent=1 // pred_check
      _
    $region15: #{tpu_custom_call.1} parent=1 // pred_check_branch
      %135 = sbr.rel (0) target = $region17
    $region16: #{tpu_custom_call.1} parent=1 // pred_region
      %s137 = ssub.s32 128, 128
      %138 = vsyncadd [#allocation3], %s137
      %s139 = sshll.u32 [#allocation2], 4
      %s140 = int_to_ptr.vmem [resolvable:$true] %s139
      %145 = dma.vmem_to_hbm [thread:$0]  %s140, 128, %s3, [#allocation3], 64, 64, 4
    $region17: #{tpu_custom_call.1} parent=1 // pred_fallthru
      _
    // Predicated region
    $region18: #{tpu_custom_call.1} parent=1 // pred_check
      _
    $region19: #{tpu_custom_call.1} parent=1 // pred_check_branch
      %147 = sbr.rel (0) target = $region21
    $region20: #{tpu_custom_call.1} parent=1 // pred_region
      _
    $region21: #{tpu_custom_call.1} parent=1 // pred_fallthru
      _
    // Predicated region
    $region22: #{tpu_custom_call.1} parent=1 // pred_check
      _
    $region23: #{tpu_custom_call.1} parent=1 // pred_check_branch
      %149 = sbr.rel (0) target = $region25
    $region24: #{tpu_custom_call.1} parent=1 // pred_region
      %150 = dma.done [#allocation3], 128
    $region25: #{tpu_custom_call.1} parent=1 // pred_fallthru
      _
    // Predicated region
    $region26: #{tpu_custom_call.1} parent=1 // pred_check
      _
    $region27: #{tpu_custom_call.1} parent=1 // pred_check_branch
      %152 = sbr.rel (0) target = $region29
    $region28: #{tpu_custom_call.1} parent=1 // pred_region
      _
    $region29: #{tpu_custom_call.1} parent=1 // pred_fallthru
      _
    %153 = vsyncpa [#allocation3], 1

</llo_original>
